<compile_context>
chip_gen: v7x
topology: tpu7x:2x2x1
jax: 0.10.0
libtpu: 0.0.40
codegen_flags: <defaults>
</compile_context>

<pallas_src>
import functools
from typing import NamedTuple, Optional

import jax
import jax.numpy as jnp
from jax.experimental import pallas as pl
from jax.experimental.pallas import tpu as pltpu


class ModulationOut(NamedTuple):
    shift: jax.Array
    scale: jax.Array
    gate: jax.Array


# --------------------------------------------------------------------------
# Kernels
# --------------------------------------------------------------------------
def _modulation_kernel(vec_ref, w_ref, b_ref, o_ref):
    """silu(vec) @ W[:, tile] + b[tile]   (no LoRA)."""
    v = vec_ref[...].astype(jnp.float32)
    x = v * jax.nn.sigmoid(v)                                # silu -> VPU/EUP
    y = jnp.dot(x.astype(w_ref.dtype), w_ref[...],           # MXU, f32 acc
                preferred_element_type=jnp.float32)
    y = y + b_ref[...].astype(jnp.float32)
    o_ref[...] = y.astype(o_ref.dtype)


def _modulation_lora_kernel(vec_ref, w_ref, b_ref, wd_ref, wu_ref, o_ref,
                            *, lora_scale: float):
    """silu(vec) @ W[:, tile] + b[tile] + scale * (silu(vec) @ Wd) @ Wu[:, tile]."""
    v = vec_ref[...].astype(jnp.float32)
    x = v * jax.nn.sigmoid(v)
    xc = x.astype(w_ref.dtype)
    y = jnp.dot(xc, w_ref[...], preferred_element_type=jnp.float32)
    y = y + b_ref[...].astype(jnp.float32)
    # LoRA path: down-projection is tiny (B x rank), recomputed per tile so the
    # grid axis can stay "parallel" (safe across TensorCores on v7x).
    d = jnp.dot(xc, wd_ref[...], preferred_element_type=jnp.float32)   # [B, rank]
    u = jnp.dot(d.astype(wu_ref.dtype), wu_ref[...],
                preferred_element_type=jnp.float32)                    # [B, TN]
    o_ref[...] = (y + u * lora_scale).astype(o_ref.dtype)


# --------------------------------------------------------------------------
# Wrapper
# --------------------------------------------------------------------------
def _pick_tile_n(out_features: int, dim: int, weight_dtype,
                 vmem_budget_bytes: int = 24 * 1024 * 1024) -> int:
    """Largest 128-multiple N tile whose double-buffered weight slab fits the
    budget (keeps us under v7x's 32 MiB default scoped VMEM)."""
    bytes_per = jnp.dtype(weight_dtype).itemsize
    max_tn = vmem_budget_bytes // (2 * dim * bytes_per)
    max_tn = max(128, (max_tn // 128) * 128)
    return min(out_features, max_tn)


def _run_modulation_kernel(vec, w_t, b2d, wd_t, wu_t, *, use_lora,
                           lora_scale, tile_n=None):
    B, dim = vec.shape
    out_features = w_t.shape[1]

    # Pad batch to an f32-sublane multiple for clean vreg layout.
    B_pad = max(8, ((B + 7) // 8) * 8)
    if B_pad != B:
        vec = jnp.pad(vec, ((0, B_pad - B), (0, 0)))

    tn = _pick_tile_n(out_features, dim, w_t.dtype) if tile_n is None \
        else min(int(tile_n), out_features)
    grid = (pl.cdiv(out_features, tn),)

    vec_spec = pl.BlockSpec((B_pad, dim), lambda j: (0, 0))
    w_spec = pl.BlockSpec((dim, tn), lambda j: (0, j))      # streamed weight tile
    b_spec = pl.BlockSpec((1, tn), lambda j: (0, j))        # per-tile bias
    out_spec = pl.BlockSpec((B_pad, tn), lambda j: (0, j))  # lane-dense output

    if use_lora:
        rank = wd_t.shape[1]
        kernel = functools.partial(_modulation_lora_kernel,
                                   lora_scale=float(lora_scale))
        in_specs = [vec_spec, w_spec, b_spec,
                    pl.BlockSpec((dim, rank), lambda j: (0, 0)),
                    pl.BlockSpec((rank, tn), lambda j: (0, j))]
        args = (vec, w_t, b2d, wd_t, wu_t)
    else:
        kernel = _modulation_kernel
        in_specs = [vec_spec, w_spec, b_spec]
        args = (vec, w_t, b2d)

    y = pl.pallas_call(
        kernel,
        out_shape=jax.ShapeDtypeStruct((B_pad, out_features), vec.dtype),
        grid=grid,
        in_specs=in_specs,
        out_specs=out_spec,
        compiler_params=pltpu.CompilerParams(
            dimension_semantics=("parallel",)),
    )(*args)
    return y[:B]


def init_modulation_params(key, dim: int, double: bool, rank: int = 32,
                           dtype=jnp.float32):
    """Deterministic synthetic init mirroring the PyTorch module, but with the
    weights stored pre-transposed ([in, out] etc.) for lane-dense MXU use."""
    multiplier = 6 if double else 3
    k1, k2, k3 = jax.random.split(key, 3)
    lin_w = jax.random.normal(k1, (multiplier * dim, dim), dtype) * 0.02   # [out, in]
    lin_b = jax.random.normal(k2, (multiplier * dim,), dtype) * 0.02       # [out]
    lora_down = jax.random.normal(k3, (rank, dim), dtype) * (1.0 / rank)   # [rank, in]
    lora_up = jnp.zeros((multiplier * dim, rank), dtype)                   # [out, rank]
    return {
        "lin_w_t": jnp.asarray(lin_w.T),        # [dim, out]
        "lin_b": lin_b,                         # [out]
        "lora_down_t": jnp.asarray(lora_down.T),  # [dim, rank]
        "lora_up_t": jnp.asarray(lora_up.T),      # [rank, out]
        "rank": rank,
        "network_alpha": 16,
        "dim": dim,
        "double": double,
        "multiplier": multiplier,
    }


def modulation_forward(params, vec, rw_mode: str = "normal", tile_n=None
                       ) -> tuple[ModulationOut, Optional[ModulationOut]]:
    """JAX/Pallas equivalent of Modulation.forward."""
    multiplier = params["multiplier"]
    use_lora = "write" in rw_mode
    lora_scale = params["network_alpha"] / params["rank"]
    b2d = params["lin_b"].reshape(1, -1)        # [1, out] — keep 2D for TPU

    y = _run_modulation_kernel(
        vec, params["lin_w_t"], b2d,
        params["lora_down_t"] if use_lora else None,
        params["lora_up_t"] if use_lora else None,
        use_lora=use_lora, lora_scale=lora_scale, tile_n=tile_n)

    y = y[:, None, :]                           # [B, 1, multiplier*dim]
    chunks = jnp.split(y, multiplier, axis=-1)  # each [B, 1, dim]
    mod1 = ModulationOut(*chunks[:3])
    mod2 = ModulationOut(*chunks[3:6]) if params["double"] else None
    return mod1, mod2


def _reference_forward(params, vec, rw_mode="normal"):
    """Pure-JAX reference for sanity checking."""
    x = jax.nn.silu(vec.astype(jnp.float32))
    y = x @ params["lin_w_t"].astype(jnp.float32) + params["lin_b"].astype(jnp.float32)
    if "write" in rw_mode:
        d = x @ params["lora_down_t"].astype(jnp.float32)
        u = d @ params["lora_up_t"].astype(jnp.float32)
        y = y + u * (params["network_alpha"] / params["rank"])
    return y.astype(vec.dtype)[:, None, :]


if __name__ == "__main__":
    key = jax.random.PRNGKey(0)
    dim = 128          # small, lane-aligned hidden size
    batch = 2
    double = True      # out_features = 6 * 128 = 768

    pkey, vkey, lkey = jax.random.split(key, 3)
    params = init_modulation_params(pkey, dim=dim, double=double)
    vec = jax.random.normal(vkey, (batch, dim), jnp.float32)

    TOL = dict(atol=1e-3, rtol=1e-3)   # MXU f32 matmul uses bf16 passes

    # 'normal' mode (no LoRA refs DMA'd); tile_n=256 -> 3-tile grid exercised.
    mod1, mod2 = modulation_forward(params, vec, rw_mode="normal", tile_n=256)
    jax.block_until_ready(mod1.shift)

    ref = _reference_forward(params, vec, "normal")
    ref_chunks = jnp.split(ref, params["multiplier"], axis=-1)
    assert jnp.allclose(mod1.shift, ref_chunks[0], **TOL)
    assert jnp.allclose(mod1.scale, ref_chunks[1], **TOL)
    assert jnp.allclose(mod1.gate, ref_chunks[2], **TOL)
    assert mod2 is not None and jnp.allclose(mod2.gate, ref_chunks[5], **TOL)

    # 'write' mode: use a non-zero LoRA up weight so the LoRA matmuls are
    # actually exercised numerically (module init has zeros -> zero delta).
    params_w = dict(params)
    params_w["lora_up_t"] = (
        jax.random.normal(lkey, params["lora_up_t"].shape, jnp.float32) * 0.02)
    mod1_w, mod2_w = modulation_forward(params_w, vec, rw_mode="write", tile_n=256)
    jax.block_until_ready(mod1_w.shift)

    ref_w = _reference_forward(params_w, vec, "write")
    ref_w_chunks = jnp.split(ref_w, params["multiplier"], axis=-1)
    assert jnp.allclose(mod1_w.shift, ref_w_chunks[0], **TOL)
    assert jnp.allclose(mod1_w.scale, ref_w_chunks[1], **TOL)
    assert mod2_w is not None and jnp.allclose(mod2_w.gate, ref_w_chunks[5], **TOL)

    # Also run with the auto-picked (large) tile and the faithful zero LoRA up.
    mod1_z, _ = modulation_forward(params, vec, rw_mode="write")
    jax.block_until_ready(mod1_z.shift)
    assert jnp.allclose(mod1_z.shift, ref_chunks[0], **TOL)  # zero LoRA == normal

    print("KERNEL_OK")
</pallas_src>

<mosaic_0001>
module attributes {stable_mosaic.version = 11 : i64} {
  func.func @_modulation_kernel(%arg0: i32, %arg1: memref<8x128xf32, #tpu.memory_space<vmem>>, %arg2: memref<128x256xf32, #tpu.memory_space<vmem>>, %arg3: memref<1x256xf32, #tpu.memory_space<vmem>>, %arg4: memref<8x256xf32, #tpu.memory_space<vmem>>) attributes {dimension_semantics = [#tpu.dimension_semantics<parallel>], iteration_bounds = array<i64: 3>, scalar_prefetch = 0 : i64, scratch_operands = 0 : i64, tpu.core_type = #tpu.core_type<tc>, window_params = [{pipeline_mode = #tpu.pipeline_mode<synchronous>, transform_indices = @transform_0, window_bounds = array<i64: 8, 128>}, {transform_indices = @transform_1, window_bounds = array<i64: 128, 256>}, {transform_indices = @transform_2, window_bounds = array<i64: 1, 256>}, {transform_indices = @transform_3, window_bounds = array<i64: 8, 256>}]} {
    %c0 = arith.constant 0 : index
    %c0_0 = arith.constant 0 : index
    %0 = vector.load %arg1[%c0, %c0_0] : memref<8x128xf32, #tpu.memory_space<vmem>>, vector<8x128xf32>
    %1 = arith.negf %0 : vector<8x128xf32>
    %2 = math.exp %1 : vector<8x128xf32>
    %cst = arith.constant 1.000000e+00 : f32
    %3 = vector.broadcast %cst : f32 to vector<8x128xf32>
    %4 = arith.addf %3, %2 : vector<8x128xf32>
    %5 = arith.divf %3, %4 : vector<8x128xf32>
    %6 = arith.mulf %0, %5 : vector<8x128xf32>
    %c0_1 = arith.constant 0 : index
    %c0_2 = arith.constant 0 : index
    %7 = vector.load %arg2[%c0_1, %c0_2] : memref<128x256xf32, #tpu.memory_space<vmem>>, vector<128x256xf32>
    %cst_3 = arith.constant dense<0.000000e+00> : vector<8x256xf32>
    %8 = tpu.matmul %6, %7, %cst_3 {dimension_numbers = #tpu.dot_dimension_numbers<[1], [0], [0], [1], [0, 0, 1, 1], [], []>} : vector<8x128xf32>, vector<128x256xf32>, vector<8x256xf32> -> vector<8x256xf32>
    %c0_4 = arith.constant 0 : index
    %c0_5 = arith.constant 0 : index
    %9 = vector.load %arg3[%c0_4, %c0_5] : memref<1x256xf32, #tpu.memory_space<vmem>>, vector<1x256xf32>
    %10 = vector.broadcast %9 : vector<1x256xf32> to vector<8x256xf32>
    %11 = arith.addf %8, %10 : vector<8x256xf32>
    %c0_6 = arith.constant 0 : index
    %c0_7 = arith.constant 0 : index
    %12 = vector.load %arg4[%c0_6, %c0_7] : memref<8x256xf32, #tpu.memory_space<vmem>>, vector<8x256xf32>
    tpu.vector_store %arg4[%c0_6, %c0_7], %11 {strides = array<i32>} : memref<8x256xf32, #tpu.memory_space<vmem>>, vector<8x256xf32>,
    return
  }
  func.func @transform_0(%arg0: i32) -> (i32, i32) {
    %c0_i32 = arith.constant 0 : i32
    %c0_i32_0 = arith.constant 0 : i32
    %c0_i32_1 = arith.constant 0 : i32
    return %c0_i32, %c0_i32_0 : i32, i32
  }
  func.func @transform_1(%arg0: i32) -> (i32, i32) {
    %c0_i32 = arith.constant 0 : i32
    %c0_i32_0 = arith.constant 0 : i32
    return %c0_i32, %arg0 : i32, i32
  }
  func.func @transform_2(%arg0: i32) -> (i32, i32) {
    %c0_i32 = arith.constant 0 : i32
    %c0_i32_0 = arith.constant 0 : i32
    return %c0_i32, %arg0 : i32, i32
  }
  func.func @transform_3(%arg0: i32) -> (i32, i32) {
    %c0_i32 = arith.constant 0 : i32
    %c0_i32_0 = arith.constant 0 : i32
    return %c0_i32, %arg0 : i32, i32
  }
}

</mosaic_0001>

<llo_original>
// kernel: tpu_custom_call.1
$region0: #{tpu_custom_call.1}
  #allocation0 [shape = 'u32[]', space=smem, size = 0x4, offset = 0x4, fixed_abs, tag = 'smem constant byte address 0x4 - core index']
  #allocation1 [shape = 'u32[144,128]{1,0:T(1,128)}', space=vmem, size = 0x12000, scoped, tag = 'internal scratch']
  %s0 = inlined_call_operand.hbm [shape: f32[8,128], index: 0, kind: input, shape index: {}]
  %s1 = inlined_call_operand.hbm [shape: f32[128,768], index: 1, kind: input, shape index: {}]
  %s2 = inlined_call_operand.vmem [shape: f32[1,768], index: 2, kind: input, shape index: {}]
  %s3 = inlined_call_operand.hbm [shape: f32[8,768], index: 3, kind: output, shape index: {}]
  %s4 = sld [smem:[#allocation0]]
  $region53: #{tpu_custom_call.1} parent=0
    _
  %s6 = ssub.s32 1, %s4
  %s7 = scalar_select 0, %s6, %s4
  $region1: #{tpu_custom_call.1} parent=0
    #allocation2 [shape = 'u8[4096]{0}', space=vmem, size = 0x1000, scoped, tag = 'input window, operand 0, single buffered']
    #allocation3 [shape = 's32[2]{0}', space=sflag, size = 0x8, scoped, tag = 'scoped memory for tpu_custom_call.1']
    #allocation4 [shape = 's32[2]{0}', space=sflag, size = 0x8, scoped, tag = 'scoped memory for tpu_custom_call.1']
    #allocation5 [shape = 'u8[262144]{0}', space=vmem, size = 0x40000, scoped, tag = 'input window, operand 1']
    #allocation6 [shape = 's32[2]{0}', space=sflag, size = 0x8, scoped, tag = 'scoped memory for tpu_custom_call.1']
    #allocation7 [shape = 'u8[16384]{0}', space=vmem, size = 0x4000, scoped, tag = 'output window, operand 0']
    %8 = vsyncpa [#allocation3], 0
    %9 = vsyncpa [#allocation6], 0
    %s10 = scalar_lea.sflag [#allocation6], 1
    %11 = vsyncpa %s10, 0
    %12 = vsyncpa [#allocation4], 0
    %s13 = scalar_lea.sflag [#allocation4], 1
    %14 = vsyncpa %s13, 0
    loop: start=0, step=1, limit=5
    $region2: #{tpu_custom_call.1} parent=1 // loop_pre_header
      _
    $region3: #{tpu_custom_call.1} parent=1 // loop_header
      %s16 = sphi 0, %s20
      %p17 = scmp.ge.s32.totalorder %s16, 5
      %s24 = sphi 0, %s24
      %s26 = sphi 0, %s24
      %s27 = sphi 0, %s26
      %s41 = sphi 0, %s27
      %s47 = sphi 0, %s49
      %s50 = sphi 0, %s47
      %s51 = sphi 0, %s50
      %s67 = sphi 0, %s51
      %s73 = sphi 0, %s75
      %s76 = sphi 0, %s73
      %s77 = sphi 0, %s76
      %s93 = sphi 0, %s77
      %s99 = sphi 0, %s101
      %s102 = sphi 0, %s99
      %s103 = sphi 0, %s102
      %s119 = sphi 0, %s103
    $region4: #{tpu_custom_call.1} parent=1 // loop_header_branch
      %19 = sbr.rel (%p17) target = $region8
    $region5: #{tpu_custom_call.1} parent=1 // loop_body
      %s21 = ssub.s32 %s16, 1
      %s22 = ssub.s32 %s16, 2
      %s23 = sadd.s32 %s16, 1
      %s25 = sadd.s32 %s24, 1
      %p28 = scmp.eq.s32.totalorder %s16, 2
      %p29 = scmp.ne.s32.totalorder %s24, %s26
      %p30 = scmp.eq.s32.totalorder %s16, 0
      %p31 = por %p29, %p30
      %p32 = scmp.ne.s32.totalorder %s24, %s26
      %p33 = scmp.eq.s32.totalorder %s21, 2
      %p34 = por %p32, %p33
      %p35 = scmp.ne.s32.totalorder %s26, %s27
      %p36 = scmp.eq.s32.totalorder %s21, 0
      %p37 = por %p35, %p36
      %p38 = scmp.ne.s32.totalorder %s26, %s27
      %p39 = scmp.eq.s32.totalorder %s22, 2
      %p40 = por %p38, %p39
      %p42 = scmp.ne.s32.totalorder %s27, %s41
      %p43 = scmp.eq.s32.totalorder %s22, 0
      %p44 = por %p42, %p43
      %s45 = ssub.s32 %s16, %s23
      %p46 = scmp.eq.s32.totalorder %s45, 0
      %s48 = sadd.s32 %s47, 1
      %s49 = scalar_select %p46, %s47, %s48
      %p52 = pneg %p46
      %p53 = scmp.eq.s32.totalorder %s16, 2
      %p54 = por %p52, %p53
      %p55 = scmp.ne.s32.totalorder %s47, %s50
      %p56 = scmp.eq.s32.totalorder %s16, 0
      %p57 = por %p55, %p56
      %p58 = scmp.ne.s32.totalorder %s47, %s50
      %p59 = scmp.eq.s32.totalorder %s21, 2
      %p60 = por %p58, %p59
      %p61 = scmp.ne.s32.totalorder %s50, %s51
      %p62 = scmp.eq.s32.totalorder %s21, 0
      %p63 = por %p61, %p62
      %p64 = scmp.ne.s32.totalorder %s50, %s51
      %p65 = scmp.eq.s32.totalorder %s22, 2
      %p66 = por %p64, %p65
      %p68 = scmp.ne.s32.totalorder %s51, %s67
      %p69 = scmp.eq.s32.totalorder %s22, 0
      %p70 = por %p68, %p69
      %s71 = ssub.s32 %s16, %s23
      %p72 = scmp.eq.s32.totalorder %s71, 0
      %s74 = sadd.s32 %s73, 1
      %s75 = scalar_select %p72, %s73, %s74
      %p78 = pneg %p72
      %p79 = scmp.eq.s32.totalorder %s16, 2
      %p80 = por %p78, %p79
      %p81 = scmp.ne.s32.totalorder %s73, %s76
      %p82 = scmp.eq.s32.totalorder %s16, 0
      %p83 = por %p81, %p82
      %p84 = scmp.ne.s32.totalorder %s73, %s76
      %p85 = scmp.eq.s32.totalorder %s21, 2
      %p86 = por %p84, %p85
      %p87 = scmp.ne.s32.totalorder %s76, %s77
      %p88 = scmp.eq.s32.totalorder %s21, 0
      %p89 = por %p87, %p88
      %p90 = scmp.ne.s32.totalorder %s76, %s77
      %p91 = scmp.eq.s32.totalorder %s22, 2
      %p92 = por %p90, %p91
      %p94 = scmp.ne.s32.totalorder %s77, %s93
      %p95 = scmp.eq.s32.totalorder %s22, 0
      %p96 = por %p94, %p95
      %s97 = ssub.s32 %s16, %s23
      %p98 = scmp.eq.s32.totalorder %s97, 0
      %s100 = sadd.s32 %s99, 1
      %s101 = scalar_select %p98, %s99, %s100
      %p104 = pneg %p98
      %p105 = scmp.eq.s32.totalorder %s16, 2
      %p106 = por %p104, %p105
      %p107 = scmp.ne.s32.totalorder %s99, %s102
      %p108 = scmp.eq.s32.totalorder %s16, 0
      %p109 = por %p107, %p108
      %p110 = scmp.ne.s32.totalorder %s99, %s102
      %p111 = scmp.eq.s32.totalorder %s21, 2
      %p112 = por %p110, %p111
      %p113 = scmp.ne.s32.totalorder %s102, %s103
      %p114 = scmp.eq.s32.totalorder %s21, 0
      %p115 = por %p113, %p114
      %p116 = scmp.ne.s32.totalorder %s102, %s103
      %p117 = scmp.eq.s32.totalorder %s22, 2
      %p118 = por %p116, %p117
      %p120 = scmp.ne.s32.totalorder %s103, %s119
      %p121 = scmp.eq.s32.totalorder %s22, 0
      %p122 = por %p120, %p121
      %p123 = scmp.le.s32.totalorder 1, %s16
      %p124 = scmp.lt.s32.totalorder %s16, 4
      %p125 = pnand %p123, %p124
      %p126 = pneg %p125
      // Predicated region
      $region9: #{tpu_custom_call.1} parent=5 // pred_check
        _
      $region10: #{tpu_custom_call.1} parent=5 // pred_check_branch
        %128 = sbr.rel (%p125) target = $region12
      $region11: #{tpu_custom_call.1} parent=5 // pred_region
        %s129 = ssub.s32 %s16, 1
        // Predicated region
        $region13: #{tpu_custom_call.1} parent=11 // pred_check
          %p130 = pneg %p37
        $region14: #{tpu_custom_call.1} parent=11 // pred_check_branch
          %132 = sbr.rel (%p130) target = $region16
        $region15: #{tpu_custom_call.1} parent=11 // pred_region
          %s134 = ssub.s32 128, 128
          %135 = vsyncadd [#allocation3], %s134
          %s137 = sshll.u32 [#allocation2], 4
          %s138 = int_to_ptr.vmem [resolvable:$true] %s137
          %140 = dma.hbm_to_vmem [thread:$0]  %s0, 128, %s138, [#allocation3]
        $region16: #{tpu_custom_call.1} parent=11 // pred_fallthru
          _
      $region12: #{tpu_custom_call.1} parent=5 // pred_fallthru
        _
      %p141 = scmp.lt.s32.totalorder %s16, 3
      // Predicated region
      $region17: #{tpu_custom_call.1} parent=5 // pred_check
        %p142 = pneg %p141
      $region18: #{tpu_custom_call.1} parent=5 // pred_check_branch
        %144 = sbr.rel (%p142) target = $region20
      $region19: #{tpu_custom_call.1} parent=5 // pred_region
        // Predicated region
        $region21: #{tpu_custom_call.1} parent=19 // pred_check
          %p145 = pneg %p57
        $region22: #{tpu_custom_call.1} parent=19 // pred_check_branch
          %147 = sbr.rel (%p145) target = $region24
        $region23: #{tpu_custom_call.1} parent=19 // pred_region
          %s148 = sand.u32 %s47, 1
          %s149 = scalar_lea.sflag [#allocation6], %s148
          %s150 = sand.u32 %s47, 1
          %s151 = smul.addr %s150, 256
          %s152 = scalar_lea.vmem [#allocation5], %s151
          %s153 = smul.u32 2, %s16
          %s155 = ssub.s32 4096, 4096
          %156 = vsyncadd %s149, %s155
          %s157 = smul.addr %s153, 128
          %s158 = scalar_lea.hbm %s1, %s157
          %s159 = sshll.u32 %s152, 4
          %s160 = int_to_ptr.vmem [resolvable:$true] %s159
          %165 = dma.hbm_to_vmem [thread:$0]  %s158, 4096, %s160, %s149, 768, 256, 16
        $region24: #{tpu_custom_call.1} parent=19 // pred_fallthru
          _
        // Predicated region
        $region25: #{tpu_custom_call.1} parent=19 // pred_check
          %p166 = pneg %p83
        $region26: #{tpu_custom_call.1} parent=19 // pred_check_branch
          %168 = sbr.rel (%p166) target = $region28
        $region27: #{tpu_custom_call.1} parent=19 // pred_region
          %s169 = smul.u32 2, %s16
          %p170 = scmp.lt.s32.totalorder %s169, 5
          %s171 = scalar_select %p170, %s169, 5
          %s172 = scalar_lea.vmem %s2, %s171
          %s173 = smul.u32 2, %s16
        $region28: #{tpu_custom_call.1} parent=19 // pred_fallthru
          _
      $region20: #{tpu_custom_call.1} parent=5 // pred_fallthru
        _
      %p174 = scmp.le.s32.totalorder 1, %s16
      %p175 = scmp.lt.s32.totalorder %s16, 4
      %p176 = pnand %p174, %p175
      %p177 = pneg %p176
      // Predicated region
      $region29: #{tpu_custom_call.1} parent=5 // pred_check
        _
      $region30: #{tpu_custom_call.1} parent=5 // pred_check_branch
        %179 = sbr.rel (%p176) target = $region32
      $region31: #{tpu_custom_call.1} parent=5 // pred_region
        %s180 = ssub.s32 %s16, 1
        // Predicated region
        $region33: #{tpu_custom_call.1} parent=31 // pred_check
          %p181 = pneg %p37
        $region34: #{tpu_custom_call.1} parent=31 // pred_check_branch
          %183 = sbr.rel (%p181) target = $region36
        $region35: #{tpu_custom_call.1} parent=31 // pred_region
          %184 = dma.done [#allocation3], 128
        $region36: #{tpu_custom_call.1} parent=31 // pred_fallthru
          _
        %s185 = sand.u32 %s50, 1
        %s186 = scalar_lea.sflag [#allocation6], %s185
        %s187 = sand.u32 %s50, 1
        %s188 = smul.addr %s187, 256
        %s189 = scalar_lea.vmem [#allocation5], %s188
        // Predicated region
        $region37: #{tpu_custom_call.1} parent=31 // pred_check
          %p190 = pneg %p63
        $region38: #{tpu_custom_call.1} parent=31 // pred_check_branch
          %192 = sbr.rel (%p190) target = $region40
        $region39: #{tpu_custom_call.1} parent=31 // pred_region
          %193 = dma.done %s186, 4096
        $region40: #{tpu_custom_call.1} parent=31 // pred_fallthru
          _
        %p194 = pneg %p37
        %p195 = pneg %p34
        %s196 = sand.u32 %s50, 1
        %s197 = scalar_lea.sflag [#allocation6], %s196
        %s198 = sand.u32 %s50, 1
        %s199 = smul.addr %s198, 256
        %s200 = scalar_lea.vmem [#allocation5], %s199
        %p201 = pneg %p63
        %p202 = pneg %p60
        %s203 = smul.u32 2, %s21
        %p204 = scmp.lt.s32.totalorder %s203, 5
        %s205 = scalar_select %p204, %s203, 5
        %s206 = scalar_lea.vmem %s2, %s205
        %p207 = pneg %p89
        %p208 = pneg %p86
        %p209 = pneg %p115
        %p210 = pneg %p112
        %s211 = sand.u32 %s102, 1
        %s212 = scalar_lea.sflag [#allocation4], %s211
        %s213 = sand.u32 %s102, 1
        %s214 = smul.addr %s213, 16
        %s215 = scalar_lea.vmem [#allocation7], %s214
        %s216 = smul.u32 2, %s21
        %s217 = smul.u32 2, %s21
        %p218 = scmp.lt.s32.totalorder %s217, 5
        %s219 = scalar_select %p218, %s217, 5
        %s220 = scalar_lea.vmem %s2, %s219
        %s221 = smul.u32 2, %s21
        %s222 = smul.u32 2, %s21
        %v223 = vld [vmem:[#allocation2] sm:$0xff]
        %v224 = vxor.u32 %v223, 2147483648
        %v225 = vmul.f32 %v224, 1.442695
        %v226 = vpow.pop %v225
        %v227 = vadd.f32 %v226, 1.0
        %v228 = vrcp.pop %v227
        %v229 = vmul.f32 1.0, %v228
        %v230 = vmul.f32 %v223, %v229
        %v231 = vld [vmem:[%s189] sm:$0xff]
        %v232 = vld [vmem:[%s189 + $0x8] sm:$0xff]
        %v233 = vld [vmem:[%s189 + $0x10] sm:$0xff]
        %v234 = vld [vmem:[%s189 + $0x18] sm:$0xff]
        %v235 = vld [vmem:[%s189 + $0x20] sm:$0xff]
        %v236 = vld [vmem:[%s189 + $0x28] sm:$0xff]
        %v237 = vld [vmem:[%s189 + $0x30] sm:$0xff]
        %v238 = vld [vmem:[%s189 + $0x38] sm:$0xff]
        %v239 = vld [vmem:[%s189 + $0x40] sm:$0xff]
        %v240 = vld [vmem:[%s189 + $0x48] sm:$0xff]
        %v241 = vld [vmem:[%s189 + $0x50] sm:$0xff]
        %v242 = vld [vmem:[%s189 + $0x58] sm:$0xff]
        %v243 = vld [vmem:[%s189 + $0x60] sm:$0xff]
        %v244 = vld [vmem:[%s189 + $0x68] sm:$0xff]
        %v245 = vld [vmem:[%s189 + $0x70] sm:$0xff]
        %v246 = vld [vmem:[%s189 + $0x78] sm:$0xff]
        %v247 = vld [vmem:[%s189 + $0x80] sm:$0xff]
        %v248 = vld [vmem:[%s189 + $0x88] sm:$0xff]
        %v249 = vld [vmem:[%s189 + $0x90] sm:$0xff]
        %v250 = vld [vmem:[%s189 + $0x98] sm:$0xff]
        %v251 = vld [vmem:[%s189 + $0xa0] sm:$0xff]
        %v252 = vld [vmem:[%s189 + $0xa8] sm:$0xff]
        %v253 = vld [vmem:[%s189 + $0xb0] sm:$0xff]
        %v254 = vld [vmem:[%s189 + $0xb8] sm:$0xff]
        %v255 = vld [vmem:[%s189 + $0xc0] sm:$0xff]
        %v256 = vld [vmem:[%s189 + $0xc8] sm:$0xff]
        %v257 = vld [vmem:[%s189 + $0xd0] sm:$0xff]
        %v258 = vld [vmem:[%s189 + $0xd8] sm:$0xff]
        %v259 = vld [vmem:[%s189 + $0xe0] sm:$0xff]
        %v260 = vld [vmem:[%s189 + $0xe8] sm:$0xff]
        %v261 = vld [vmem:[%s189 + $0xf0] sm:$0xff]
        %v262 = vld [vmem:[%s189 + $0xf8] sm:$0xff]
        %v263 = vld [vmem:[%s220] sm:$0x3]
        %v265 = vlaneseq
        %v266 = vshrl.u32 %v265, 7
        %v267 = vsub.s32 0, %v266
        %v268 = vrot.slane %v263, %v267
        %v269 = vlaneseq
        %v270 = vshrl.u32 %v269, 7
        %v271 = vsub.s32 1, %v270
        %v272 = vrot.slane %v263, %v271
        %275 = vmatprep.subr.mxu0 %v232
        %276 = vmatpush1.msra.mxu0 %v231
        %277 = vmatprep.subr.mxu0 %v234
        %278 = vmatpush1.msra.mxu0 %v233
        %279 = vmatprep.subr.mxu0 %v236
        %280 = vmatpush1.msra.mxu0 %v235
        %281 = vmatprep.subr.mxu0 %v238
        %282 = vmatpush1.msra.mxu0 %v237
        %283 = vmatprep.subr.mxu0 %v240
        %284 = vmatpush1.msra.mxu0 %v239
        %285 = vmatprep.subr.mxu0 %v242
        %286 = vmatpush1.msra.mxu0 %v241
        %287 = vmatprep.subr.mxu0 %v244
        %288 = vmatpush1.msra.mxu0 %v243
        %289 = vmatprep.subr.mxu0 %v246
        %290 = vmatpush1.msra.mxu0 %v245
        %291 = vmatprep.subr.mxu0 %v248
        %292 = vmatpush1.msra.mxu0 %v247
        %293 = vmatprep.subr.mxu0 %v250
        %294 = vmatpush1.msra.mxu0 %v249
        %295 = vmatprep.subr.mxu0 %v252
        %296 = vmatpush1.msra.mxu0 %v251
        %297 = vmatprep.subr.mxu0 %v254
        %298 = vmatpush1.msra.mxu0 %v253
        %299 = vmatprep.subr.mxu0 %v256
        %300 = vmatpush1.msra.mxu0 %v255
        %301 = vmatprep.subr.mxu0 %v258
        %302 = vmatpush1.msra.mxu0 %v257
        %303 = vmatprep.subr.mxu0 %v260
        %304 = vmatpush1.msra.mxu0 %v259
        %305 = vmatprep.subr.mxu0 %v262
        %306 = vmatpush1.msra.mxu0 %v261
        %307 = vmatprep.subr.mxu0 0.0
        %308 = vmatpush1.msra.mxu0 0.0
        %309 = vmatprep.subr.mxu0 0.0
        %310 = vmatpush1.msra.mxu0 0.0
        %311 = vmatprep.subr.mxu0 0.0
        %312 = vmatpush1.msra.mxu0 0.0
        %313 = vmatprep.subr.mxu0 0.0
        %314 = vmatpush1.msra.mxu0 0.0
        %315 = vmatprep.subr.mxu0 0.0
        %316 = vmatpush1.msra.mxu0 0.0
        %317 = vmatprep.subr.mxu0 0.0
        %318 = vmatpush1.msra.mxu0 0.0
        %319 = vmatprep.subr.mxu0 0.0
        %320 = vmatpush1.msra.mxu0 0.0
        %321 = vmatprep.subr.mxu0 0.0
        %322 = vmatpush1.msra.mxu0 0.0
        %323 = vmatprep.subr.mxu0 0.0
        %324 = vmatpush1.msra.mxu0 0.0
        %325 = vmatprep.subr.mxu0 0.0
        %326 = vmatpush1.msra.mxu0 0.0
        %327 = vmatprep.subr.mxu0 0.0
        %328 = vmatpush1.msra.mxu0 0.0
        %329 = vmatprep.subr.mxu0 0.0
        %330 = vmatpush1.msra.mxu0 0.0
        %331 = vmatprep.subr.mxu0 0.0
        %332 = vmatpush1.msra.mxu0 0.0
        %333 = vmatprep.subr.mxu0 0.0
        %334 = vmatpush1.msra.mxu0 0.0
        %335 = vmatprep.subr.mxu0 0.0
        %336 = vmatpush1.msra.mxu0 0.0
        %337 = vmatprep.subr.mxu0 0.0
        %338 = vmatpush1.msra.mxu0 0.0
        %339 = vmatprep.mubr.f32.mxu0 0.0
        %340 = vmatmul.mubr.f32.gmra.mrb[0].mxu0 %v230
        %v341 = vpop.f32.mrb[0].mxu0
        %v342 = vadd.f32 %v268, %v341
        %v343 = vpop.f32.mrb[0].mxu0
        %v344 = vadd.f32 %v272, %v343
        %345 = vdwg.mxu0
        %346 = vst [vmem:[%s215] sm:$0xff] %v342
        %347 = vst [vmem:[%s215 + $0x8] sm:$0xff] %v344
        %s348 = sand.u32 %s102, 1
        %s349 = scalar_lea.sflag [#allocation4], %s348
        %s350 = sand.u32 %s102, 1
        %s351 = smul.addr %s350, 16
        %s352 = scalar_lea.vmem [#allocation7], %s351
        // Predicated region
        $region41: #{tpu_custom_call.1} parent=31 // pred_check
          %p353 = pneg %p112
        $region42: #{tpu_custom_call.1} parent=31 // pred_check_branch
          %355 = sbr.rel (%p353) target = $region44
        $region43: #{tpu_custom_call.1} parent=31 // pred_region
          %s356 = smul.u32 2, %s21
          %s358 = ssub.s32 256, 256
          %359 = vsyncadd %s349, %s358
          %s360 = smul.addr %s356, 128
          %s361 = scalar_lea.hbm %s3, %s360
          %s363 = sshll.u32 %s352, 4
          %s364 = int_to_ptr.vmem [resolvable:$true] %s363
          %366 = dma.vmem_to_hbm [thread:$0]  %s364, 256, %s361, %s349
        $region44: #{tpu_custom_call.1} parent=31 // pred_fallthru
          _
      $region32: #{tpu_custom_call.1} parent=5 // pred_fallthru
        _
      %p367 = scmp.le.s32.totalorder 2, %s16
      // Predicated region
      $region45: #{tpu_custom_call.1} parent=5 // pred_check
        %p368 = pneg %p367
      $region46: #{tpu_custom_call.1} parent=5 // pred_check_branch
        %370 = sbr.rel (%p368) target = $region48
      $region47: #{tpu_custom_call.1} parent=5 // pred_region
        %s371 = ssub.s32 %s16, 2
        // Predicated region
        $region49: #{tpu_custom_call.1} parent=47 // pred_check
          %p372 = pneg %p118
        $region50: #{tpu_custom_call.1} parent=47 // pred_check_branch
          %374 = sbr.rel (%p372) target = $region52
        $region51: #{tpu_custom_call.1} parent=47 // pred_region
          %s375 = sand.u32 %s103, 1
          %s376 = scalar_lea.sflag [#allocation4], %s375
          %s377 = sand.u32 %s103, 1
          %s378 = smul.addr %s377, 16
          %s379 = scalar_lea.vmem [#allocation7], %s378
          %380 = dma.done %s376, 256
        $region52: #{tpu_custom_call.1} parent=47 // pred_fallthru
          _
      $region48: #{tpu_custom_call.1} parent=5 // pred_fallthru
        _
    $region6: #{tpu_custom_call.1} parent=1 // loop_footer
      %s20 = sadd.s32 1, %s16
    $region7: #{tpu_custom_call.1} parent=1 // loop_footer_branch
      %15 = sbr.rel target = $region3
    $region8: #{tpu_custom_call.1} parent=1 // loop_exit
      _
    %381 = vsyncpa [#allocation3], 1
    %s382 = scalar_lea.sflag [#allocation3], 1
    %383 = vsyncpa %s382, 1
    %384 = vsyncpa [#allocation6], 1
    %s385 = scalar_lea.sflag [#allocation6], 1
    %386 = vsyncpa %s385, 1
    %387 = vsyncpa [#allocation4], 1
    %s388 = scalar_lea.sflag [#allocation4], 1
    %389 = vsyncpa %s388, 1

</llo_original>
